<compile_context>
chip_gen: v5e
topology: v5e:2x2
jax: 0.10.0
libtpu: 0.0.40
codegen_flags: <defaults>
</compile_context>

<pallas_src>
import jax
import jax.numpy as jnp
from jax import lax
from jax.experimental import pallas as pl
from jax.experimental.pallas import tpu as pltpu


def _round_up(x, m):
    return ((x + m - 1) // m) * m


def _make_ff_net_kernel(num_layers):
    """Fused forward: per layer h = relu((h @ W_t) * rsqrt(||h||^2) + b)."""

    def kernel(*refs):
        x_ref = refs[0]
        o_ref = refs[-1]
        wb_refs = refs[1:-1]          # w0, b0, w1, b1, ...

        h = x_ref[...].astype(jnp.float32)
        for l in range(num_layers):
            w = wb_refs[2 * l][...]           # (d_in, d_out) = W.T (resident)
            b = wb_refs[2 * l + 1][...]       # (1, d_out)
            # torch F.normalize eps: x / max(||x||, 1e-12)  ==  x * rsqrt(max(||x||^2, 1e-24))
            sq = jnp.sum(h * h, axis=1, keepdims=True)        # XLU row reduce
            inv_norm = lax.rsqrt(jnp.maximum(sq, 1e-24))      # EUP rsqrt
            y = jnp.dot(h, w, preferred_element_type=jnp.float32)  # MXU
            y = y * inv_norm + b              # deferred normalization scale
            h = jnp.maximum(y, 0.0)           # ReLU
        o_ref[...] = h.astype(o_ref.dtype)

    return kernel


def ff_net_forward(params, x, *, tm=None):
    """Net.forward fused into a single pallas_call.

    params: list of (w, b) with w shape (out_f, in_f), b shape (out_f,)
            (same shapes as torch nn.Linear).
    x:      (B, D_in) float32 (a 1-D input is treated as a single row,
            matching Layer.forward's unsqueeze).
    """
    squeeze = False
    if x.ndim == 1:
        x = x[None, :]
        squeeze = True

    B, d_in0 = x.shape
    num_layers = len(params)
    d_out_last = params[-1][0].shape[0]
    # Lane-dense final store: pad last layer width to a multiple of 128.
    d_out_pad = _round_up(d_out_last, 128)

    # --- batch tile size: as large as possible within a conservative budget
    if tm is None:
        vmem_budget = 8 << 20                                   # activation tiles
        bytes_per_row = 2 * 2 * 4 * (d_in0 + d_out_pad)         # dbl-buffered in+out, f32
        tm = max(8, min(1024, vmem_budget // max(bytes_per_row, 1)))
        tm = (tm // 8) * 8
    tm = min(tm, _round_up(max(B, 8), 8))
    tm = max(8, (tm // 8) * 8)
    b_pad = _round_up(B, tm)
    grid = (pl.cdiv(b_pad, tm),)

    # --- prepare operands
    x_pad = x.astype(jnp.float32)
    if b_pad != B:
        x_pad = jnp.pad(x_pad, ((0, b_pad - B), (0, 0)))

    operands = [x_pad]
    in_specs = [pl.BlockSpec((tm, d_in0), lambda i: (i, 0))]
    weight_bytes = 0
    for l, (w, b) in enumerate(params):
        out_f, in_f = w.shape
        w_t = jnp.transpose(w).astype(jnp.float32)              # (in_f, out_f)
        b2 = b.astype(jnp.float32).reshape(1, out_f)
        if l == num_layers - 1 and out_f != d_out_pad:
            w_t = jnp.pad(w_t, ((0, 0), (0, d_out_pad - out_f)))
            b2 = jnp.pad(b2, ((0, 0), (0, d_out_pad - out_f)))
        operands += [w_t, b2]
        in_specs += [
            pl.BlockSpec(w_t.shape, lambda i: (0, 0)),          # resident weights
            pl.BlockSpec(b2.shape, lambda i: (0, 0)),           # resident bias
        ]
        weight_bytes += 4 * (w_t.size + b2.size)

    out_specs = pl.BlockSpec((tm, d_out_pad), lambda i: (i, 0))

    # VMEM limit with headroom (fits v7x's 64 MiB physical / 32 MiB scoped).
    act_bytes = 2 * 4 * tm * (d_in0 + d_out_pad)                # dbl-buffered tiles
    vmem_limit = min(max(2 * (act_bytes + 2 * weight_bytes) + (4 << 20), 8 << 20),
                     32 << 20)

    out = pl.pallas_call(
        _make_ff_net_kernel(num_layers),
        out_shape=jax.ShapeDtypeStruct((b_pad, d_out_pad), jnp.float32),
        grid_spec=pltpu.PrefetchScalarGridSpec(
            num_scalar_prefetch=0,
            grid=grid,
            in_specs=in_specs,
            out_specs=out_specs,
        ),
        compiler_params=pltpu.CompilerParams(
            dimension_semantics=("parallel",),
            vmem_limit_bytes=vmem_limit,
        ),
    )(*operands)

    out = out[:B, :d_out_last]
    if squeeze:
        out = out[0]
    return out


def init_net_params(key, dims):
    """Deterministic init matching nn.Linear shapes: weight (out,in), bias (out,)."""
    params = []
    for d in range(len(dims) - 1):
        key, kw, kb = jax.random.split(key, 3)
        in_f, out_f = dims[d], dims[d + 1]
        bound = 1.0 / jnp.sqrt(in_f)
        w = jax.random.uniform(kw, (out_f, in_f), jnp.float32, -bound, bound)
        b = jax.random.uniform(kb, (out_f,), jnp.float32, -bound, bound)
        params.append((w, b))
    return params


if __name__ == "__main__":
    key = jax.random.PRNGKey(0)
    dims = [16, 32, 32]          # small Forward-Forward net: 16 -> 32 -> 32
    batch = 8

    key, kx = jax.random.split(key)
    x = jax.random.normal(kx, (batch, dims[0]), dtype=jnp.float32)

    params = init_net_params(key, dims)

    out = ff_net_forward(params, x)
    out = jax.block_until_ready(out)

    # pure-JAX reference of the same math (torch F.normalize semantics)
    def ref_forward(params, x):
        h = x
        for w, b in params:
            n = jnp.maximum(jnp.linalg.norm(h, axis=1, keepdims=True), 1e-12)
            h = jnp.maximum(jnp.dot(h / n, w.T) + b[None, :], 0.0)
        return h

    ref = ref_forward(params, x)
    assert out.shape == (batch, dims[-1])
    assert jnp.allclose(out, ref, atol=1e-5, rtol=1e-5)

    # also exercise the 1-D input path of Layer.forward
    out1d = jax.block_until_ready(ff_net_forward(params, x[0]))
    assert jnp.allclose(out1d, ref[0], atol=1e-5, rtol=1e-5)

    print("KERNEL_OK")
</pallas_src>

<mosaic_0001>
module attributes {stable_mosaic.version = 11 : i64} {
  func.func @kernel(%arg0: i32, %arg1: memref<8x16xf32, #tpu.memory_space<vmem>>, %arg2: memref<16x32xf32, #tpu.memory_space<vmem>>, %arg3: memref<1x32xf32, #tpu.memory_space<vmem>>, %arg4: memref<32x128xf32, #tpu.memory_space<vmem>>, %arg5: memref<1x128xf32, #tpu.memory_space<vmem>>, %arg6: memref<8x128xf32, #tpu.memory_space<vmem>>) attributes {dimension_semantics = [#tpu.dimension_semantics<parallel>], iteration_bounds = array<i64: 1>, scalar_prefetch = 0 : i64, scratch_operands = 0 : i64, tpu.core_type = #tpu.core_type<tc>, window_params = [{transform_indices = @transform_0, window_bounds = array<i64: 8, 16>}, {pipeline_mode = #tpu.pipeline_mode<synchronous>, transform_indices = @transform_1, window_bounds = array<i64: 16, 32>}, {pipeline_mode = #tpu.pipeline_mode<synchronous>, transform_indices = @transform_2, window_bounds = array<i64: 1, 32>}, {pipeline_mode = #tpu.pipeline_mode<synchronous>, transform_indices = @transform_3, window_bounds = array<i64: 32, 128>}, {pipeline_mode = #tpu.pipeline_mode<synchronous>, transform_indices = @transform_4, window_bounds = array<i64: 1, 128>}, {transform_indices = @transform_5, window_bounds = array<i64: 8, 128>}]} {
    %c0 = arith.constant 0 : index
    %c0_0 = arith.constant 0 : index
    %0 = vector.load %arg1[%c0, %c0_0] : memref<8x16xf32, #tpu.memory_space<vmem>>, vector<8x16xf32>
    %c0_1 = arith.constant 0 : index
    %c0_2 = arith.constant 0 : index
    %1 = vector.load %arg2[%c0_1, %c0_2] : memref<16x32xf32, #tpu.memory_space<vmem>>, vector<16x32xf32>
    %c0_3 = arith.constant 0 : index
    %c0_4 = arith.constant 0 : index
    %2 = vector.load %arg3[%c0_3, %c0_4] : memref<1x32xf32, #tpu.memory_space<vmem>>, vector<1x32xf32>
    %3 = arith.mulf %0, %0 : vector<8x16xf32>
    %cst = arith.constant dense<0.000000e+00> : vector<8xf32>
    %4 = vector.multi_reduction <add>, %3, %cst [1] : vector<8x16xf32> to vector<8xf32>
    %5 = vector.shape_cast %4 : vector<8xf32> to vector<8x1xf32>
    %cst_5 = arith.constant 1.000000e-24 : f32
    %6 = vector.broadcast %cst_5 : f32 to vector<8x1xf32>
    %7 = arith.maximumf %5, %6 : vector<8x1xf32>
    %8 = math.rsqrt %7 : vector<8x1xf32>
    %cst_6 = arith.constant dense<0.000000e+00> : vector<8x32xf32>
    %9 = tpu.matmul %0, %1, %cst_6 {dimension_numbers = #tpu.dot_dimension_numbers<[1], [0], [0], [1], [0, 0, 1, 1], [], []>} : vector<8x16xf32>, vector<16x32xf32>, vector<8x32xf32> -> vector<8x32xf32>
    %10 = vector.broadcast %8 : vector<8x1xf32> to vector<8x32xf32>
    %11 = arith.mulf %9, %10 : vector<8x32xf32>
    %12 = vector.broadcast %2 : vector<1x32xf32> to vector<8x32xf32>
    %13 = arith.addf %11, %12 : vector<8x32xf32>
    %cst_7 = arith.constant 0.000000e+00 : f32
    %14 = vector.broadcast %cst_7 : f32 to vector<8x32xf32>
    %15 = arith.maximumf %13, %14 : vector<8x32xf32>
    %c0_8 = arith.constant 0 : index
    %c0_9 = arith.constant 0 : index
    %16 = vector.load %arg4[%c0_8, %c0_9] : memref<32x128xf32, #tpu.memory_space<vmem>>, vector<32x128xf32>
    %c0_10 = arith.constant 0 : index
    %c0_11 = arith.constant 0 : index
    %17 = vector.load %arg5[%c0_10, %c0_11] : memref<1x128xf32, #tpu.memory_space<vmem>>, vector<1x128xf32>
    %18 = arith.mulf %15, %15 : vector<8x32xf32>
    %cst_12 = arith.constant dense<0.000000e+00> : vector<8xf32>
    %19 = vector.multi_reduction <add>, %18, %cst_12 [1] : vector<8x32xf32> to vector<8xf32>
    %20 = vector.shape_cast %19 : vector<8xf32> to vector<8x1xf32>
    %cst_13 = arith.constant 1.000000e-24 : f32
    %21 = vector.broadcast %cst_13 : f32 to vector<8x1xf32>
    %22 = arith.maximumf %20, %21 : vector<8x1xf32>
    %23 = math.rsqrt %22 : vector<8x1xf32>
    %cst_14 = arith.constant dense<0.000000e+00> : vector<8x128xf32>
    %24 = tpu.matmul %15, %16, %cst_14 {dimension_numbers = #tpu.dot_dimension_numbers<[1], [0], [0], [1], [0, 0, 1, 1], [], []>} : vector<8x32xf32>, vector<32x128xf32>, vector<8x128xf32> -> vector<8x128xf32>
    %25 = vector.broadcast %23 : vector<8x1xf32> to vector<8x128xf32>
    %26 = arith.mulf %24, %25 : vector<8x128xf32>
    %27 = vector.broadcast %17 : vector<1x128xf32> to vector<8x128xf32>
    %28 = arith.addf %26, %27 : vector<8x128xf32>
    %cst_15 = arith.constant 0.000000e+00 : f32
    %29 = vector.broadcast %cst_15 : f32 to vector<8x128xf32>
    %30 = arith.maximumf %28, %29 : vector<8x128xf32>
    %c0_16 = arith.constant 0 : index
    %c0_17 = arith.constant 0 : index
    %31 = vector.load %arg6[%c0_16, %c0_17] : memref<8x128xf32, #tpu.memory_space<vmem>>, vector<8x128xf32>
    tpu.vector_store %arg6[%c0_16, %c0_17], %30 {strides = array<i32>} : memref<8x128xf32, #tpu.memory_space<vmem>>, vector<8x128xf32>,
    return
  }
  func.func @transform_0(%arg0: i32) -> (i32, i32) {
    %c0_i32 = arith.constant 0 : i32
    %c0_i32_0 = arith.constant 0 : i32
    return %arg0, %c0_i32 : i32, i32
  }
  func.func @transform_1(%arg0: i32) -> (i32, i32) {
    %c0_i32 = arith.constant 0 : i32
    %c0_i32_0 = arith.constant 0 : i32
    %c0_i32_1 = arith.constant 0 : i32
    return %c0_i32, %c0_i32_0 : i32, i32
  }
  func.func @transform_2(%arg0: i32) -> (i32, i32) {
    %c0_i32 = arith.constant 0 : i32
    %c0_i32_0 = arith.constant 0 : i32
    %c0_i32_1 = arith.constant 0 : i32
    return %c0_i32, %c0_i32_0 : i32, i32
  }
  func.func @transform_3(%arg0: i32) -> (i32, i32) {
    %c0_i32 = arith.constant 0 : i32
    %c0_i32_0 = arith.constant 0 : i32
    %c0_i32_1 = arith.constant 0 : i32
    return %c0_i32, %c0_i32_0 : i32, i32
  }
  func.func @transform_4(%arg0: i32) -> (i32, i32) {
    %c0_i32 = arith.constant 0 : i32
    %c0_i32_0 = arith.constant 0 : i32
    %c0_i32_1 = arith.constant 0 : i32
    return %c0_i32, %c0_i32_0 : i32, i32
  }
  func.func @transform_5(%arg0: i32) -> (i32, i32) {
    %c0_i32 = arith.constant 0 : i32
    %c0_i32_0 = arith.constant 0 : i32
    return %arg0, %c0_i32 : i32, i32
  }
}

</mosaic_0001>

<llo_original>
// kernel: tpu_custom_call.1
$region0: #{tpu_custom_call.1}
  #allocation0 [shape = 'u32[]', space=smem, size = 0x4, offset = 0x4, fixed_abs, tag = 'smem constant byte address 0x4 - core index']
  #allocation1 [shape = 'u32[72,128]{1,0:T(1,128)}', space=vmem, size = 0x9000, scoped, tag = 'internal scratch']
  %s0 = inlined_call_operand.hbm [shape: f32[8,16], index: 0, kind: input, shape index: {}]
  %s1 = inlined_call_operand.hbm [shape: f32[16,32], index: 1, kind: input, shape index: {}]
  %s2 = inlined_call_operand.vmem [shape: f32[1,32], index: 2, kind: input, shape index: {}]
  %s3 = inlined_call_operand.hbm [shape: f32[32,128], index: 3, kind: input, shape index: {}]
  %s4 = inlined_call_operand.vmem [shape: f32[1,128], index: 4, kind: input, shape index: {}]
  %s5 = inlined_call_operand.hbm [shape: f32[8,128], index: 5, kind: output, shape index: {}]
  %s6 = sld [smem:[#allocation0]]
  $region42: #{tpu_custom_call.1} parent=0
    _
  %s8 = ssub.s32 1, %s6
  %s9 = scalar_select 0, %s8, %s6
  $region1: #{tpu_custom_call.1} parent=0
    #allocation2 [shape = 'u8[4096]{0}', space=vmem, size = 0x1000, scoped, tag = 'input window, operand 0, single buffered']
    #allocation3 [shape = 's32[1]{0}', space=sflag, size = 0x4, scoped, tag = 'scoped memory for tpu_custom_call.1']
    #allocation4 [shape = 's32[1]{0}', space=sflag, size = 0x4, scoped, tag = 'scoped memory for tpu_custom_call.1']
    #allocation5 [shape = 'u8[8192]{0}', space=vmem, size = 0x2000, scoped, tag = 'input window, operand 1, single buffered']
    #allocation6 [shape = 's32[1]{0}', space=sflag, size = 0x4, scoped, tag = 'scoped memory for tpu_custom_call.1']
    #allocation7 [shape = 'u8[16384]{0}', space=vmem, size = 0x4000, scoped, tag = 'input window, operand 3, single buffered']
    #allocation8 [shape = 'u8[4096]{0}', space=vmem, size = 0x1000, scoped, tag = 'output window, operand 0, single buffered']
    %10 = vsyncpa [#allocation3], 0
    %11 = vsyncpa [#allocation6], 0
    %12 = vsyncpa [#allocation4], 0
    // Predicated region
    $region2: #{tpu_custom_call.1} parent=1 // pred_check
      _
    $region3: #{tpu_custom_call.1} parent=1 // pred_check_branch
      %14 = sbr.rel (0) target = $region5
    $region4: #{tpu_custom_call.1} parent=1 // pred_region
      %16 = vsyncadd [#allocation3], 0
      %s18 = sshll.u32 %s0, 4
      %s19 = int_to_ptr.hbm [resolvable:$true] %s18
      %s20 = sshll.u32 [#allocation2], 4
      %s21 = int_to_ptr.vmem [resolvable:$true] %s20
      %23 = dma.hbm_to_vmem [thread:$0]  %s19, 128, %s21, [#allocation3]
    $region5: #{tpu_custom_call.1} parent=1 // pred_fallthru
      _
    // Predicated region
    $region6: #{tpu_custom_call.1} parent=1 // pred_check
      _
    $region7: #{tpu_custom_call.1} parent=1 // pred_check_branch
      %25 = sbr.rel (0) target = $region9
    $region8: #{tpu_custom_call.1} parent=1 // pred_region
      %27 = vsyncadd [#allocation6], 0
      %s28 = sshll.u32 %s1, 4
      %s29 = int_to_ptr.hbm [resolvable:$true] %s28
      %s30 = sshll.u32 [#allocation5], 4
      %s31 = int_to_ptr.vmem [resolvable:$true] %s30
      %36 = dma.hbm_to_vmem [thread:$0]  %s29, 256, %s31, [#allocation6], 128, 128, 8
    $region9: #{tpu_custom_call.1} parent=1 // pred_fallthru
      _
    // Predicated region
    $region10: #{tpu_custom_call.1} parent=1 // pred_check
      _
    $region11: #{tpu_custom_call.1} parent=1 // pred_check_branch
      %38 = sbr.rel (0) target = $region13
    $region12: #{tpu_custom_call.1} parent=1 // pred_region
      _
    $region13: #{tpu_custom_call.1} parent=1 // pred_fallthru
      _
    // Predicated region
    $region14: #{tpu_custom_call.1} parent=1 // pred_check
      _
    $region15: #{tpu_custom_call.1} parent=1 // pred_check_branch
      %40 = sbr.rel (0) target = $region17
    $region16: #{tpu_custom_call.1} parent=1 // pred_region
      %42 = vsyncadd [#allocation6], 0
      %s43 = sshll.u32 %s3, 4
      %s44 = int_to_ptr.hbm [resolvable:$true] %s43
      %s45 = sshll.u32 [#allocation7], 4
      %s46 = int_to_ptr.vmem [resolvable:$true] %s45
      %51 = dma.hbm_to_vmem [thread:$0]  %s44, 512, %s46, [#allocation6], 128, 128, 8
    $region17: #{tpu_custom_call.1} parent=1 // pred_fallthru
      _
    // Predicated region
    $region18: #{tpu_custom_call.1} parent=1 // pred_check
      _
    $region19: #{tpu_custom_call.1} parent=1 // pred_check_branch
      %53 = sbr.rel (0) target = $region21
    $region20: #{tpu_custom_call.1} parent=1 // pred_region
      _
    $region21: #{tpu_custom_call.1} parent=1 // pred_fallthru
      _
    // Predicated region
    $region22: #{tpu_custom_call.1} parent=1 // pred_check
      _
    $region23: #{tpu_custom_call.1} parent=1 // pred_check_branch
      %55 = sbr.rel (0) target = $region25
    $region24: #{tpu_custom_call.1} parent=1 // pred_region
      %57 = dma.done [#allocation3], 128
    $region25: #{tpu_custom_call.1} parent=1 // pred_fallthru
      _
    // Predicated region
    $region26: #{tpu_custom_call.1} parent=1 // pred_check
      _
    $region27: #{tpu_custom_call.1} parent=1 // pred_check_branch
      %59 = sbr.rel (0) target = $region29
    $region28: #{tpu_custom_call.1} parent=1 // pred_region
      %61 = dma.done [#allocation6], 256
    $region29: #{tpu_custom_call.1} parent=1 // pred_fallthru
      _
    // Predicated region
    $region30: #{tpu_custom_call.1} parent=1 // pred_check
      _
    $region31: #{tpu_custom_call.1} parent=1 // pred_check_branch
      %63 = sbr.rel (0) target = $region33
    $region32: #{tpu_custom_call.1} parent=1 // pred_region
      %65 = dma.done [#allocation6], 512
    $region33: #{tpu_custom_call.1} parent=1 // pred_fallthru
      _
    %v66 = vld [vmem:[#allocation2] sm:$0xff]
    %v67 = vld [vmem:[#allocation5] sm:$0xff]
    %v68 = vld [vmem:[#allocation5 + $0x8] sm:$0xff]
    %v69 = vld [vmem:[%s2] sm:$0x1]
    %v70 = vmul.f32 %v66, %v66
    %vm71 = vcmask 130048
    %v72 = vsel %vm71, %v70, 0.0
    %73 = vadd.xlane.f32.xlu0 %v72
    %v74 = vpop.xlane.xlu0 %73
    %v75 = vmax.f32 %v74, 1e-24
    %v76 = vrsqrt.pop %v75
    %v77 = vmul.f32 %v76, %v75
    %v78 = vmul.f32 %v77, %v76
    %v79 = vmul.f32 0.5, %v78
    %v80 = vsub.f32 1.5, %v79
    %v81 = vmul.f32 %v76, %v80
    %vm82 = vweird.f32 %v75
    %vm83 = vweird.f32 %v76
    %vm84 = vmor %vm82, %vm83
    %v85 = vsel %vm84, %v76, %v81
    %v87 = vsel %vm71, %v66, 0
    %89 = vmatpush.msra.mxu0 0.0
    %90 = vmatpush.msra.mxu0 0.0
    %91 = vmatpush.msra.mxu0 0.0
    %92 = vmatpush.msra.mxu0 0.0
    %93 = vmatpush.msra.mxu0 0.0
    %94 = vmatpush.msra.mxu0 0.0
    %95 = vmatpush.msra.mxu0 0.0
    %96 = vmatpush.msra.mxu0 0.0
    %97 = vmatpush.msra.mxu0 0.0
    %98 = vmatpush.msra.mxu0 0.0
    %99 = vmatpush.msra.mxu0 0.0
    %100 = vmatpush.msra.mxu0 0.0
    %101 = vmatpush.msra.mxu0 0.0
    %102 = vmatpush.msra.mxu0 0.0
    %103 = vmatpush.msra.mxu0 %v68
    %104 = vmatpush.msra.mxu0 %v67
    %105 = vmatmul.f32.gmra.mxu0 %v87
    %v106 = vpop.f32.mrf.mxu0
    %v107 = vadd.f32 0.0, %v106
    %108 = vdwg.mxu0
    %v109 = vmul.f32 %v107, %v85
    %v111 = vperm.slane %v69, 0
    %v113 = vadd.f32 %v109, %v111
    %v114 = vmax.f32 %v113, 0.0
    %v115 = vld [vmem:[#allocation7] sm:$0xff]
    %v116 = vld [vmem:[#allocation7 + $0x8] sm:$0xff]
    %v117 = vld [vmem:[#allocation7 + $0x10] sm:$0xff]
    %v118 = vld [vmem:[#allocation7 + $0x18] sm:$0xff]
    %v119 = vld [vmem:[%s4] sm:$0x1]
    %v120 = vmul.f32 %v114, %v114
    %vm121 = vcmask 261120
    %v122 = vsel %vm121, %v120, 0.0
    %123 = vadd.xlane.f32.xlu0 %v122
    %v124 = vpop.xlane.xlu0 %123
    %v125 = vmax.f32 %v124, 1e-24
    %v126 = vrsqrt.pop %v125
    %v127 = vmul.f32 %v126, %v125
    %v128 = vmul.f32 %v127, %v126
    %v129 = vmul.f32 0.5, %v128
    %v130 = vsub.f32 1.5, %v129
    %v131 = vmul.f32 %v126, %v130
    %vm132 = vweird.f32 %v125
    %vm133 = vweird.f32 %v126
    %vm134 = vmor %vm132, %vm133
    %v135 = vsel %vm134, %v126, %v131
    %v137 = vsel %vm121, %v114, 0
    %139 = vmatpush.msra.mxu0 0.0
    %140 = vmatpush.msra.mxu0 0.0
    %141 = vmatpush.msra.mxu0 0.0
    %142 = vmatpush.msra.mxu0 0.0
    %143 = vmatpush.msra.mxu0 0.0
    %144 = vmatpush.msra.mxu0 0.0
    %145 = vmatpush.msra.mxu0 0.0
    %146 = vmatpush.msra.mxu0 0.0
    %147 = vmatpush.msra.mxu0 0.0
    %148 = vmatpush.msra.mxu0 0.0
    %149 = vmatpush.msra.mxu0 0.0
    %150 = vmatpush.msra.mxu0 0.0
    %151 = vmatpush.msra.mxu0 %v118
    %152 = vmatpush.msra.mxu0 %v117
    %153 = vmatpush.msra.mxu0 %v116
    %154 = vmatpush.msra.mxu0 %v115
    %155 = vmatmul.f32.gmra.mxu0 %v137
    %v156 = vpop.f32.mrf.mxu0
    %v157 = vadd.f32 0.0, %v156
    %158 = vdwg.mxu0
    %v159 = vmul.f32 %v157, %v135
    %v161 = vperm.slane %v119, 0
    %v163 = vadd.f32 %v159, %v161
    %v164 = vmax.f32 %v163, 0.0
    %165 = vst [vmem:[#allocation8] sm:$0xff] %v164
    // Predicated region
    $region34: #{tpu_custom_call.1} parent=1 // pred_check
      _
    $region35: #{tpu_custom_call.1} parent=1 // pred_check_branch
      %167 = sbr.rel (0) target = $region37
    $region36: #{tpu_custom_call.1} parent=1 // pred_region
      %169 = vsyncadd [#allocation4], 0
      %s171 = sshll.u32 [#allocation8], 4
      %s172 = int_to_ptr.vmem [resolvable:$true] %s171
      %s173 = sshll.u32 %s5, 4
      %s174 = int_to_ptr.hbm [resolvable:$true] %s173
      %176 = dma.vmem_to_hbm [thread:$0]  %s172, 128, %s174, [#allocation4]
    $region37: #{tpu_custom_call.1} parent=1 // pred_fallthru
      _
    // Predicated region
    $region38: #{tpu_custom_call.1} parent=1 // pred_check
      _
    $region39: #{tpu_custom_call.1} parent=1 // pred_check_branch
      %178 = sbr.rel (0) target = $region41
    $region40: #{tpu_custom_call.1} parent=1 // pred_region
      %180 = dma.done [#allocation4], 128
    $region41: #{tpu_custom_call.1} parent=1 // pred_fallthru
      _
    %181 = vsyncpa [#allocation3], 1
    %182 = vsyncpa [#allocation6], 1
    %183 = vsyncpa [#allocation4], 1

</llo_original>
